<compile_context>
chip_gen: v6e
topology: v6e:2x2x1
jax: 0.10.0
libtpu: 0.0.40
codegen_flags: <defaults>
</compile_context>

<pallas_src>
import functools

import jax
import jax.numpy as jnp
from jax.experimental import pallas as pl
from jax.experimental.pallas import tpu as pltpu

LANE = 128
MAX_TILE_M = 512                       # cap on the batch tile
VMEM_LIMIT_BYTES = 32 * 1024 * 1024    # explicit scoped-VMEM budget (safe on v5e/v6e/v7x)


def _round_up(n, m):
    return ((n + m - 1) // m) * m


def _batch_tiling(n):
    """Pick (n_pad, tile_m) for a batch of n rows.

    * tiny batches pad only to 8 sublanes (no 256-row padding waste),
    * anything larger gets an even number (>=2) of grid steps so the
      "parallel" batch axis can shard across v7x's 2 TensorCores,
    * tiles are capped at MAX_TILE_M (amortizes the ~0.35us/step overhead
      while keeping per-step VMEM small on every generation).
    """
    n8 = _round_up(max(int(n), 1), 8)
    if n8 <= 8:
        return 8, 8
    num_tiles = max(2, pl.cdiv(n8, MAX_TILE_M))
    num_tiles += num_tiles % 2                     # even -> both v7x cores busy
    tile = _round_up(pl.cdiv(n8, num_tiles), 8)
    n_pad = _round_up(n8, tile)
    return n_pad, tile


# --------------------------- in-kernel helpers -------------------------------
def _mlp3(x, w1, b1, w2, b2, w3, b3):
    """Fused 3-layer MLP: bf16 MXU inputs, f32 accumulation / elementwise."""
    f32 = jnp.float32
    h = jnp.dot(x.astype(jnp.bfloat16), w1[...], preferred_element_type=f32)
    h = jnp.maximum(h + b1[...].astype(f32), 0.0)
    h = jnp.dot(h.astype(jnp.bfloat16), w2[...], preferred_element_type=f32)
    h = jnp.maximum(h + b2[...].astype(f32), 0.0)
    h = jnp.dot(h.astype(jnp.bfloat16), w3[...], preferred_element_type=f32)
    return h + b3[...].astype(f32)


# ------------------------------- kernels --------------------------------------
def mlp3_kernel(x_ref, w1, b1, w2, b2, w3, b3, out_ref):
    """Generator or discriminator MLP: one batch tile per grid step."""
    out_ref[...] = _mlp3(x_ref[...], w1, b1, w2, b2, w3, b3).astype(out_ref.dtype)


def gan_fused_kernel(z_ref, gw1, gb1, gw2, gb2, gw3, gb3,
                     dw1, db1, dw2, db2, dw3, db3, logit_ref):
    """Fused D(G(z)): generated samples never leave VMEM."""
    samples = _mlp3(z_ref[...], gw1, gb1, gw2, gb2, gw3, gb3)
    logits = _mlp3(samples, dw1, db1, dw2, db2, dw3, db3)
    logit_ref[...] = logits.astype(logit_ref.dtype)


# ----------------------------- pallas wrappers --------------------------------
@functools.partial(jax.jit, static_argnames=("tile_m", "out_dtype"))
def mlp3_pallas(x_pad, w1, b1, w2, b2, w3, b3, *, tile_m, out_dtype):
    n, d_in = x_pad.shape
    hid = w1.shape[1]
    d_out = w3.shape[1]
    weights = (w1, b1, w2, b2, w3, b3)
    flops = 2 * n * (d_in * hid + hid * hid + hid * d_out)
    bytes_accessed = (x_pad.size * x_pad.dtype.itemsize
                      + sum(int(w.size) * w.dtype.itemsize for w in weights)
                      + n * d_out * jnp.dtype(out_dtype).itemsize)
    return pl.pallas_call(
        mlp3_kernel,
        out_shape=jax.ShapeDtypeStruct((n, d_out), out_dtype),
        grid=(n // tile_m,),
        in_specs=[pl.BlockSpec((tile_m, d_in), lambda i: (i, 0))]
        + [pl.BlockSpec(w.shape, lambda i: (0, 0)) for w in weights],
        out_specs=pl.BlockSpec((tile_m, d_out), lambda i: (i, 0)),
        compiler_params=pltpu.CompilerParams(
            dimension_semantics=("parallel",),
            vmem_limit_bytes=VMEM_LIMIT_BYTES),
        cost_estimate=pl.CostEstimate(flops=flops, transcendentals=0,
                                      bytes_accessed=bytes_accessed),
    )(x_pad, *weights)


@functools.partial(jax.jit, static_argnames=("tile_m",))
def gan_fused_pallas(z_pad, gw1, gb1, gw2, gb2, gw3, gb3,
                     dw1, db1, dw2, db2, dw3, db3, *, tile_m):
    n, lat = z_pad.shape
    d_out = dw3.shape[1]
    weights = (gw1, gb1, gw2, gb2, gw3, gb3, dw1, db1, dw2, db2, dw3, db3)
    mats = (gw1, gw2, gw3, dw1, dw2, dw3)
    flops = 2 * n * sum(m.shape[0] * m.shape[1] for m in mats)
    bytes_accessed = (z_pad.size * z_pad.dtype.itemsize
                      + sum(int(w.size) * w.dtype.itemsize for w in weights)
                      + n * d_out * 2)
    return pl.pallas_call(
        gan_fused_kernel,
        out_shape=jax.ShapeDtypeStruct((n, d_out), jnp.bfloat16),
        grid=(n // tile_m,),
        in_specs=[pl.BlockSpec((tile_m, lat), lambda i: (i, 0))]
        + [pl.BlockSpec(w.shape, lambda i: (0, 0)) for w in weights],
        out_specs=pl.BlockSpec((tile_m, d_out), lambda i: (i, 0)),
        compiler_params=pltpu.CompilerParams(
            dimension_semantics=("parallel",),
            vmem_limit_bytes=VMEM_LIMIT_BYTES),
        cost_estimate=pl.CostEstimate(flops=flops, transcendentals=0,
                                      bytes_accessed=bytes_accessed),
    )(z_pad, *weights)


# ------------------------------ parameters ------------------------------------
def init_linear(key, fan_in, fan_out, fan_in_pad, fan_out_pad):
    """PyTorch nn.Linear-style init at logical sizes, zero-padded, stored bf16."""
    kw, kb = jax.random.split(key)
    bound = 1.0 / float(fan_in) ** 0.5
    w = jax.random.uniform(kw, (fan_in, fan_out), jnp.float32, -bound, bound)
    b = jax.random.uniform(kb, (1, fan_out), jnp.float32, -bound, bound)
    w = jnp.pad(w, ((0, fan_in_pad - fan_in), (0, fan_out_pad - fan_out)))
    b = jnp.pad(b, ((0, 0), (0, fan_out_pad - fan_out)))
    return w.astype(jnp.bfloat16), b.astype(jnp.bfloat16)


def init_mlp(key, d_in, d_out, hidden, d_in_pad, d_out_pad, hidden_pad):
    k1, k2, k3 = jax.random.split(key, 3)
    w1, b1 = init_linear(k1, d_in, hidden, d_in_pad, hidden_pad)
    w2, b2 = init_linear(k2, hidden, hidden, hidden_pad, hidden_pad)
    w3, b3 = init_linear(k3, hidden, d_out, hidden_pad, d_out_pad)
    return (w1, b1, w2, b2, w3, b3)


# -------------------------------- GAN module -----------------------------------
class GAN:
    """JAX/Pallas port of the reference GAN (standard-normal prior + MLP nets)."""

    def __init__(self, dim, latent_dim, hidden, key):
        self.dim, self.latent_dim, self.hidden = dim, latent_dim, hidden
        self.dim_pad = _round_up(dim, LANE)
        self.latent_pad = _round_up(latent_dim, LANE)
        self.hidden_pad = _round_up(hidden, LANE)
        self.out_pad = LANE                          # discriminator head padded 1 -> 128
        kg, kd, kp = jax.random.split(key, 3)
        self.generator_params = init_mlp(
            kg, latent_dim, dim, hidden, self.latent_pad, self.dim_pad, self.hidden_pad)
        self.discriminator_params = init_mlp(
            kd, dim, 1, hidden, self.dim_pad, self.out_pad, self.hidden_pad)
        # register_buffer('placeholder', torch.randn(1))
        self.placeholder = jax.random.normal(kp, (1,), jnp.float32)

    # prior.sample((num_samples,)) -- sampled at the padded shape; padded latent
    # lanes only ever multiply into zero-padded rows of w1, so they contribute 0.
    def _sample_prior_padded(self, n_pad, seed):
        key = jax.random.PRNGKey(seed)
        return jax.random.normal(key, (n_pad, self.latent_pad), jnp.float32)

    def generate(self, num_samples, context=None, *, seed=0, return_z=False):
        del context  # base_network context is unused in this canonical MLP
        n_pad, tile_m = _batch_tiling(num_samples)
        z_pad = self._sample_prior_padded(n_pad, seed)
        samples_pad = mlp3_pallas(z_pad, *self.generator_params,
                                  tile_m=tile_m, out_dtype=jnp.float32)
        samples = samples_pad[:num_samples, :self.dim]
        if return_z:
            return samples, z_pad[:num_samples, :self.latent_dim]
        return samples

    def discriminate(self, x, context=None):
        del context
        n, d = x.shape
        n_pad, tile_m = _batch_tiling(n)
        if n_pad != n or d != self.dim_pad:
            # single pad op; the f32->bf16 cast happens inside the kernel
            x = jnp.pad(x, ((0, n_pad - n), (0, self.dim_pad - d)))
        logits = mlp3_pallas(x, *self.discriminator_params,
                             tile_m=tile_m, out_dtype=jnp.bfloat16)
        return logits[:n, :1].astype(jnp.float32)

    def discriminate_generated(self, num_samples, context=None, *, seed=0, return_z=False):
        """Fused D(G(z)) training hot path: single kernel, samples stay in VMEM."""
        del context
        n_pad, tile_m = _batch_tiling(num_samples)
        z_pad = self._sample_prior_padded(n_pad, seed)
        logits_pad = gan_fused_pallas(
            z_pad, *self.generator_params, *self.discriminator_params, tile_m=tile_m)
        logits = logits_pad[:num_samples, :1].astype(jnp.float32)
        if return_z:
            return logits, z_pad[:num_samples, :self.latent_dim]
        return logits

    def calculate_loss_gen(self, input, context=None):
        raise Exception("Not Implemented")           # as in the reference

    def calculate_loss_disc(self, input, context=None):
        raise Exception("Not Implemented")           # as in the reference

    def forward(self, *args, **kwargs):
        raise Exception("Not Implemented")           # as in the reference
    # TODO(synk): losses/forward raise in the PyTorch reference; preserved as raising stubs.


# --------------------- pure-JAX reference (mirrors kernel numerics) ------------
def mlp3_ref(x, params):
    w1, b1, w2, b2, w3, b3 = params
    f32 = jnp.float32
    h = jnp.dot(x.astype(jnp.bfloat16), w1, preferred_element_type=f32) + b1.astype(f32)
    h = jnp.maximum(h, 0.0)
    h = jnp.dot(h.astype(jnp.bfloat16), w2, preferred_element_type=f32) + b2.astype(f32)
    h = jnp.maximum(h, 0.0)
    return jnp.dot(h.astype(jnp.bfloat16), w3, preferred_element_type=f32) + b3.astype(f32)


if __name__ == "__main__":
    key = jax.random.PRNGKey(0)
    k_model, k_data = jax.random.split(key)

    DIM, LATENT, HIDDEN, BATCH = 16, 8, 32, 2
    gan = GAN(dim=DIM, latent_dim=LATENT, hidden=HIDDEN, key=k_model)

    # generate(): prior sample -> generator MLP (Pallas).
    samples, z = gan.generate(BATCH, seed=1234, return_z=True)
    samples = jax.block_until_ready(samples)
    assert samples.shape == (BATCH, DIM)
    assert z.shape == (BATCH, LATENT)
    assert bool(jnp.all(jnp.isfinite(samples)))

    z_pad = jnp.zeros((BATCH, gan.latent_pad), jnp.float32)
    z_pad = z_pad.at[:, :LATENT].set(z)
    gen_ref = mlp3_ref(z_pad, gan.generator_params)[:, :DIM]
    assert jnp.allclose(samples, gen_ref, atol=2e-2, rtol=2e-2)

    # discriminate(): data -> discriminator MLP (Pallas).
    x = jax.random.normal(k_data, (BATCH, DIM), jnp.float32)
    scores = gan.discriminate(x)
    scores = jax.block_until_ready(scores)
    assert scores.shape == (BATCH, 1)

    x_pad = jnp.zeros((BATCH, gan.dim_pad), jnp.float32)
    x_pad = x_pad.at[:, :DIM].set(x)
    disc_ref = mlp3_ref(x_pad, gan.discriminator_params)[:, :1]
    assert jnp.allclose(scores, disc_ref, atol=2e-2, rtol=2e-2)

    # Fused D(G(z)) path.
    logits, z2 = gan.discriminate_generated(BATCH, seed=1234, return_z=True)
    logits = jax.block_until_ready(logits)
    assert logits.shape == (BATCH, 1)

    z2_pad = jnp.zeros((BATCH, gan.latent_pad), jnp.float32)
    z2_pad = z2_pad.at[:, :LATENT].set(z2)
    samp_ref = mlp3_ref(z2_pad, gan.generator_params)
    fused_ref = mlp3_ref(samp_ref, gan.discriminator_params)[:, :1]
    assert jnp.allclose(logits, fused_ref, atol=2e-2, rtol=2e-2)

    print("KERNEL_OK")
</pallas_src>

<mosaic_0001>
module attributes {stable_mosaic.version = 11 : i64} {
  func.func @mlp3_kernel(%arg0: i32, %arg1: memref<8x128xf32, #tpu.memory_space<vmem>>, %arg2: memref<128x128xbf16, #tpu.memory_space<vmem>>, %arg3: memref<1x128xbf16, #tpu.memory_space<vmem>>, %arg4: memref<128x128xbf16, #tpu.memory_space<vmem>>, %arg5: memref<1x128xbf16, #tpu.memory_space<vmem>>, %arg6: memref<128x128xbf16, #tpu.memory_space<vmem>>, %arg7: memref<1x128xbf16, #tpu.memory_space<vmem>>, %arg8: memref<8x128xf32, #tpu.memory_space<vmem>>) attributes {dimension_semantics = [#tpu.dimension_semantics<parallel>], iteration_bounds = array<i64: 1>, scalar_prefetch = 0 : i64, scratch_operands = 0 : i64, tpu.core_type = #tpu.core_type<tc>, window_params = [{transform_indices = @transform_0, window_bounds = array<i64: 8, 128>}, {pipeline_mode = #tpu.pipeline_mode<synchronous>, transform_indices = @transform_1, window_bounds = array<i64: 128, 128>}, {pipeline_mode = #tpu.pipeline_mode<synchronous>, transform_indices = @transform_2, window_bounds = array<i64: 1, 128>}, {pipeline_mode = #tpu.pipeline_mode<synchronous>, transform_indices = @transform_3, window_bounds = array<i64: 128, 128>}, {pipeline_mode = #tpu.pipeline_mode<synchronous>, transform_indices = @transform_4, window_bounds = array<i64: 1, 128>}, {pipeline_mode = #tpu.pipeline_mode<synchronous>, transform_indices = @transform_5, window_bounds = array<i64: 128, 128>}, {pipeline_mode = #tpu.pipeline_mode<synchronous>, transform_indices = @transform_6, window_bounds = array<i64: 1, 128>}, {transform_indices = @transform_7, window_bounds = array<i64: 8, 128>}]} {
    %c0 = arith.constant 0 : index
    %c0_0 = arith.constant 0 : index
    %0 = vector.load %arg1[%c0, %c0_0] : memref<8x128xf32, #tpu.memory_space<vmem>>, vector<8x128xf32>
    %1 = arith.truncf %0 : vector<8x128xf32> to vector<8x128xbf16>
    %c0_1 = arith.constant 0 : index
    %c0_2 = arith.constant 0 : index
    %2 = vector.load %arg2[%c0_1, %c0_2] : memref<128x128xbf16, #tpu.memory_space<vmem>>, vector<128x128xbf16>
    %cst = arith.constant dense<0.000000e+00> : vector<8x128xf32>
    %3 = tpu.matmul %1, %2, %cst {dimension_numbers = #tpu.dot_dimension_numbers<[1], [0], [0], [1], [0, 0, 1, 1], [], []>} : vector<8x128xbf16>, vector<128x128xbf16>, vector<8x128xf32> -> vector<8x128xf32>
    %c0_3 = arith.constant 0 : index
    %c0_4 = arith.constant 0 : index
    %4 = vector.load %arg3[%c0_3, %c0_4] : memref<1x128xbf16, #tpu.memory_space<vmem>>, vector<1x128xbf16>
    %5 = arith.extf %4 : vector<1x128xbf16> to vector<1x128xf32>
    %6 = vector.broadcast %5 : vector<1x128xf32> to vector<8x128xf32>
    %7 = arith.addf %3, %6 : vector<8x128xf32>
    %cst_5 = arith.constant 0.000000e+00 : f32
    %8 = vector.broadcast %cst_5 : f32 to vector<8x128xf32>
    %9 = arith.maximumf %7, %8 : vector<8x128xf32>
    %10 = arith.truncf %9 : vector<8x128xf32> to vector<8x128xbf16>
    %c0_6 = arith.constant 0 : index
    %c0_7 = arith.constant 0 : index
    %11 = vector.load %arg4[%c0_6, %c0_7] : memref<128x128xbf16, #tpu.memory_space<vmem>>, vector<128x128xbf16>
    %cst_8 = arith.constant dense<0.000000e+00> : vector<8x128xf32>
    %12 = tpu.matmul %10, %11, %cst_8 {dimension_numbers = #tpu.dot_dimension_numbers<[1], [0], [0], [1], [0, 0, 1, 1], [], []>} : vector<8x128xbf16>, vector<128x128xbf16>, vector<8x128xf32> -> vector<8x128xf32>
    %c0_9 = arith.constant 0 : index
    %c0_10 = arith.constant 0 : index
    %13 = vector.load %arg5[%c0_9, %c0_10] : memref<1x128xbf16, #tpu.memory_space<vmem>>, vector<1x128xbf16>
    %14 = arith.extf %13 : vector<1x128xbf16> to vector<1x128xf32>
    %15 = vector.broadcast %14 : vector<1x128xf32> to vector<8x128xf32>
    %16 = arith.addf %12, %15 : vector<8x128xf32>
    %cst_11 = arith.constant 0.000000e+00 : f32
    %17 = vector.broadcast %cst_11 : f32 to vector<8x128xf32>
    %18 = arith.maximumf %16, %17 : vector<8x128xf32>
    %19 = arith.truncf %18 : vector<8x128xf32> to vector<8x128xbf16>
    %c0_12 = arith.constant 0 : index
    %c0_13 = arith.constant 0 : index
    %20 = vector.load %arg6[%c0_12, %c0_13] : memref<128x128xbf16, #tpu.memory_space<vmem>>, vector<128x128xbf16>
    %cst_14 = arith.constant dense<0.000000e+00> : vector<8x128xf32>
    %21 = tpu.matmul %19, %20, %cst_14 {dimension_numbers = #tpu.dot_dimension_numbers<[1], [0], [0], [1], [0, 0, 1, 1], [], []>} : vector<8x128xbf16>, vector<128x128xbf16>, vector<8x128xf32> -> vector<8x128xf32>
    %c0_15 = arith.constant 0 : index
    %c0_16 = arith.constant 0 : index
    %22 = vector.load %arg7[%c0_15, %c0_16] : memref<1x128xbf16, #tpu.memory_space<vmem>>, vector<1x128xbf16>
    %23 = arith.extf %22 : vector<1x128xbf16> to vector<1x128xf32>
    %24 = vector.broadcast %23 : vector<1x128xf32> to vector<8x128xf32>
    %25 = arith.addf %21, %24 : vector<8x128xf32>
    %c0_17 = arith.constant 0 : index
    %c0_18 = arith.constant 0 : index
    %26 = vector.load %arg8[%c0_17, %c0_18] : memref<8x128xf32, #tpu.memory_space<vmem>>, vector<8x128xf32>
    tpu.vector_store %arg8[%c0_17, %c0_18], %25 {strides = array<i32>} : memref<8x128xf32, #tpu.memory_space<vmem>>, vector<8x128xf32>,
    return
  }
  func.func @transform_0(%arg0: i32) -> (i32, i32) {
    %c0_i32 = arith.constant 0 : i32
    %c0_i32_0 = arith.constant 0 : i32
    return %arg0, %c0_i32 : i32, i32
  }
  func.func @transform_1(%arg0: i32) -> (i32, i32) {
    %c0_i32 = arith.constant 0 : i32
    %c0_i32_0 = arith.constant 0 : i32
    %c0_i32_1 = arith.constant 0 : i32
    return %c0_i32, %c0_i32_0 : i32, i32
  }
  func.func @transform_2(%arg0: i32) -> (i32, i32) {
    %c0_i32 = arith.constant 0 : i32
    %c0_i32_0 = arith.constant 0 : i32
    %c0_i32_1 = arith.constant 0 : i32
    return %c0_i32, %c0_i32_0 : i32, i32
  }
  func.func @transform_3(%arg0: i32) -> (i32, i32) {
    %c0_i32 = arith.constant 0 : i32
    %c0_i32_0 = arith.constant 0 : i32
    %c0_i32_1 = arith.constant 0 : i32
    return %c0_i32, %c0_i32_0 : i32, i32
  }
  func.func @transform_4(%arg0: i32) -> (i32, i32) {
    %c0_i32 = arith.constant 0 : i32
    %c0_i32_0 = arith.constant 0 : i32
    %c0_i32_1 = arith.constant 0 : i32
    return %c0_i32, %c0_i32_0 : i32, i32
  }
  func.func @transform_5(%arg0: i32) -> (i32, i32) {
    %c0_i32 = arith.constant 0 : i32
    %c0_i32_0 = arith.constant 0 : i32
    %c0_i32_1 = arith.constant 0 : i32
    return %c0_i32, %c0_i32_0 : i32, i32
  }
  func.func @transform_6(%arg0: i32) -> (i32, i32) {
    %c0_i32 = arith.constant 0 : i32
    %c0_i32_0 = arith.constant 0 : i32
    %c0_i32_1 = arith.constant 0 : i32
    return %c0_i32, %c0_i32_0 : i32, i32
  }
  func.func @transform_7(%arg0: i32) -> (i32, i32) {
    %c0_i32 = arith.constant 0 : i32
    %c0_i32_0 = arith.constant 0 : i32
    return %arg0, %c0_i32 : i32, i32
  }
}

</mosaic_0001>

<llo_original>
// kernel: mlp3_pallas.1
$region0: #{mlp3_pallas.1}
  #allocation0 [shape = 'u32[]', space=smem, size = 0x4, offset = 0x4, fixed_abs, tag = 'smem constant byte address 0x4 - core index']
  #allocation1 [shape = 'u32[144,128]{1,0:T(1,128)}', space=vmem, size = 0x12000, scoped, tag = 'internal scratch']
  %s0 = inlined_call_operand.hbm [shape: f32[8,128], index: 0, kind: input, shape index: {}]
  %s1 = inlined_call_operand.hbm [shape: bf16[128,128], index: 1, kind: input, shape index: {}]
  %s2 = inlined_call_operand.vmem [shape: bf16[1,128], index: 2, kind: input, shape index: {}]
  %s3 = inlined_call_operand.hbm [shape: bf16[128,128], index: 3, kind: input, shape index: {}]
  %s4 = inlined_call_operand.vmem [shape: bf16[1,128], index: 4, kind: input, shape index: {}]
  %s5 = inlined_call_operand.hbm [shape: bf16[128,128], index: 5, kind: input, shape index: {}]
  %s6 = inlined_call_operand.vmem [shape: bf16[1,128], index: 6, kind: input, shape index: {}]
  %s7 = inlined_call_operand.hbm [shape: f32[8,128], index: 7, kind: output, shape index: {}]
  %s8 = sld [smem:[#allocation0]]
  $region54: #{mlp3_pallas.1} parent=0
    _
  %s10 = ssub.s32 1, %s8
  %s11 = scalar_select 0, %s10, %s8
  $region1: #{mlp3_pallas.1} parent=0
    #allocation2 [shape = 'u8[4096]{0}', space=vmem, size = 0x1000, scoped, tag = 'input window, operand 0, single buffered']
    #allocation3 [shape = 's32[1]{0}', space=sflag, size = 0x4, scoped, tag = 'scoped memory for mlp3_pallas.1']
    #allocation4 [shape = 's32[1]{0}', space=sflag, size = 0x4, scoped, tag = 'scoped memory for mlp3_pallas.1']
    #allocation5 [shape = 'u8[32768]{0}', space=vmem, size = 0x8000, scoped, tag = 'input window, operand 1, single buffered']
    #allocation6 [shape = 's32[1]{0}', space=sflag, size = 0x4, scoped, tag = 'scoped memory for mlp3_pallas.1']
    #allocation7 [shape = 'u8[32768]{0}', space=vmem, size = 0x8000, scoped, tag = 'input window, operand 3, single buffered']
    #allocation8 [shape = 'u8[32768]{0}', space=vmem, size = 0x8000, scoped, tag = 'input window, operand 5, single buffered']
    #allocation9 [shape = 's32[1]{0}', space=sflag, size = 0x4, scoped, tag = 'scoped memory for mlp3_pallas.1']
    #allocation10 [shape = 'u8[4096]{0}', space=vmem, size = 0x1000, scoped, tag = 'output window, operand 0, single buffered']
    %12 = vsyncpa [#allocation3], 0
    %13 = vsyncpa [#allocation6], 0
    %14 = vsyncpa [#allocation9], 0
    %15 = vsyncpa [#allocation4], 0
    // Predicated region
    $region2: #{mlp3_pallas.1} parent=1 // pred_check
      _
    $region3: #{mlp3_pallas.1} parent=1 // pred_check_branch
      %17 = sbr.rel (0) target = $region5
    $region4: #{mlp3_pallas.1} parent=1 // pred_region
      %s19 = ssub.s32 128, 128
      %20 = vsyncadd [#allocation3], %s19
      %s22 = sshll.u32 [#allocation2], 4
      %s23 = int_to_ptr.vmem [resolvable:$true] %s22
      %25 = dma.hbm_to_vmem [thread:$0]  %s0, 128, %s23, [#allocation3]
    $region5: #{mlp3_pallas.1} parent=1 // pred_fallthru
      _
    // Predicated region
    $region6: #{mlp3_pallas.1} parent=1 // pred_check
      _
    $region7: #{mlp3_pallas.1} parent=1 // pred_check_branch
      %27 = sbr.rel (0) target = $region9
    $region8: #{mlp3_pallas.1} parent=1 // pred_region
      %s29 = ssub.s32 1024, 1024
      %30 = vsyncadd [#allocation6], %s29
      %s31 = sshll.u32 [#allocation5], 4
      %s32 = int_to_ptr.vmem [resolvable:$true] %s31
      %37 = dma.hbm_to_vmem [thread:$0]  %s1, 1024, %s32, [#allocation6], 64, 64, 4
    $region9: #{mlp3_pallas.1} parent=1 // pred_fallthru
      _
    // Predicated region
    $region10: #{mlp3_pallas.1} parent=1 // pred_check
      _
    $region11: #{mlp3_pallas.1} parent=1 // pred_check_branch
      %39 = sbr.rel (0) target = $region13
    $region12: #{mlp3_pallas.1} parent=1 // pred_region
      _
    $region13: #{mlp3_pallas.1} parent=1 // pred_fallthru
      _
    // Predicated region
    $region14: #{mlp3_pallas.1} parent=1 // pred_check
      _
    $region15: #{mlp3_pallas.1} parent=1 // pred_check_branch
      %41 = sbr.rel (0) target = $region17
    $region16: #{mlp3_pallas.1} parent=1 // pred_region
      %s43 = ssub.s32 1024, 1024
      %44 = vsyncadd [#allocation6], %s43
      %s45 = sshll.u32 [#allocation7], 4
      %s46 = int_to_ptr.vmem [resolvable:$true] %s45
      %51 = dma.hbm_to_vmem [thread:$0]  %s3, 1024, %s46, [#allocation6], 64, 64, 4
    $region17: #{mlp3_pallas.1} parent=1 // pred_fallthru
      _
    // Predicated region
    $region18: #{mlp3_pallas.1} parent=1 // pred_check
      _
    $region19: #{mlp3_pallas.1} parent=1 // pred_check_branch
      %53 = sbr.rel (0) target = $region21
    $region20: #{mlp3_pallas.1} parent=1 // pred_region
      _
    $region21: #{mlp3_pallas.1} parent=1 // pred_fallthru
      _
    // Predicated region
    $region22: #{mlp3_pallas.1} parent=1 // pred_check
      _
    $region23: #{mlp3_pallas.1} parent=1 // pred_check_branch
      %55 = sbr.rel (0) target = $region25
    $region24: #{mlp3_pallas.1} parent=1 // pred_region
      %s57 = ssub.s32 1024, 1024
      %58 = vsyncadd [#allocation9], %s57
      %s59 = sshll.u32 [#allocation8], 4
      %s60 = int_to_ptr.vmem [resolvable:$true] %s59
      %65 = dma.hbm_to_vmem [thread:$0]  %s5, 1024, %s60, [#allocation9], 64, 64, 4
    $region25: #{mlp3_pallas.1} parent=1 // pred_fallthru
      _
    // Predicated region
    $region26: #{mlp3_pallas.1} parent=1 // pred_check
      _
    $region27: #{mlp3_pallas.1} parent=1 // pred_check_branch
      %67 = sbr.rel (0) target = $region29
    $region28: #{mlp3_pallas.1} parent=1 // pred_region
      _
    $region29: #{mlp3_pallas.1} parent=1 // pred_fallthru
      _
    // Predicated region
    $region30: #{mlp3_pallas.1} parent=1 // pred_check
      _
    $region31: #{mlp3_pallas.1} parent=1 // pred_check_branch
      %69 = sbr.rel (0) target = $region33
    $region32: #{mlp3_pallas.1} parent=1 // pred_region
      %70 = dma.done [#allocation3], 128
    $region33: #{mlp3_pallas.1} parent=1 // pred_fallthru
      _
    // Predicated region
    $region34: #{mlp3_pallas.1} parent=1 // pred_check
      _
    $region35: #{mlp3_pallas.1} parent=1 // pred_check_branch
      %72 = sbr.rel (0) target = $region37
    $region36: #{mlp3_pallas.1} parent=1 // pred_region
      %73 = dma.done [#allocation6], 1024
    $region37: #{mlp3_pallas.1} parent=1 // pred_fallthru
      _
    // Predicated region
    $region38: #{mlp3_pallas.1} parent=1 // pred_check
      _
    $region39: #{mlp3_pallas.1} parent=1 // pred_check_branch
      %75 = sbr.rel (0) target = $region41
    $region40: #{mlp3_pallas.1} parent=1 // pred_region
      %76 = dma.done [#allocation6], 1024
    $region41: #{mlp3_pallas.1} parent=1 // pred_fallthru
      _
    // Predicated region
    $region42: #{mlp3_pallas.1} parent=1 // pred_check
      _
    $region43: #{mlp3_pallas.1} parent=1 // pred_check_branch
      %78 = sbr.rel (0) target = $region45
    $region44: #{mlp3_pallas.1} parent=1 // pred_region
      %79 = dma.done [#allocation9], 1024
    $region45: #{mlp3_pallas.1} parent=1 // pred_fallthru
      _
    %v81 = vld [vmem:[#allocation2] sm:$0xff]
    %v82 = vpack.c.bf16 %v81, %v81
    %v83 = vld [vmem:[#allocation5] sm:$0xf]
    %v84 = vld [vmem:[#allocation5 + $0x4] sm:$0xf]
    %v85 = vld [vmem:[#allocation5 + $0x8] sm:$0xf]
    %v86 = vld [vmem:[#allocation5 + $0xc] sm:$0xf]
    %v87 = vld [vmem:[#allocation5 + $0x10] sm:$0xf]
    %v88 = vld [vmem:[#allocation5 + $0x14] sm:$0xf]
    %v89 = vld [vmem:[#allocation5 + $0x18] sm:$0xf]
    %v90 = vld [vmem:[#allocation5 + $0x1c] sm:$0xf]
    %v91 = vld [vmem:[#allocation5 + $0x20] sm:$0xf]
    %v92 = vld [vmem:[#allocation5 + $0x24] sm:$0xf]
    %v93 = vld [vmem:[#allocation5 + $0x28] sm:$0xf]
    %v94 = vld [vmem:[#allocation5 + $0x2c] sm:$0xf]
    %v95 = vld [vmem:[#allocation5 + $0x30] sm:$0xf]
    %v96 = vld [vmem:[#allocation5 + $0x34] sm:$0xf]
    %v97 = vld [vmem:[#allocation5 + $0x38] sm:$0xf]
    %v98 = vld [vmem:[#allocation5 + $0x3c] sm:$0xf]
    %v99 = vld [vmem:[%s2] sm:$0x1]
    %v100 = vunpack.c.l.bf16 %v99
    %v101 = vlaneseq
    %v102 = vshrl.u32 %v101, 7
    %v103 = vsub.s32 0, %v102
    %v104 = vrot.slane %v100, %v103
    %v121 = vunpack.c.l.b16 %v83
    %v122 = vunpack.c.l.b16 %v84
    %v123 = vunpack.c.l.b16 %v85
    %v124 = vunpack.c.l.b16 %v86
    %v125 = vunpack.c.l.b16 %v87
    %v126 = vunpack.c.l.b16 %v88
    %v127 = vunpack.c.l.b16 %v89
    %v128 = vunpack.c.l.b16 %v90
    %v129 = vunpack.c.l.b16 %v91
    %v130 = vunpack.c.l.b16 %v92
    %v131 = vunpack.c.l.b16 %v93
    %v132 = vunpack.c.l.b16 %v94
    %v133 = vunpack.c.l.b16 %v95
    %v134 = vunpack.c.l.b16 %v96
    %v135 = vunpack.c.l.b16 %v97
    %v136 = vunpack.c.l.b16 %v98
    %v137 = vpack.c.b16 %v122, %v121
    %v138 = vpack.c.b16 %v124, %v123
    %v139 = vpack.c.b16 %v126, %v125
    %v140 = vpack.c.b16 %v128, %v127
    %v141 = vpack.c.b16 %v130, %v129
    %v142 = vpack.c.b16 %v132, %v131
    %v143 = vpack.c.b16 %v134, %v133
    %v144 = vpack.c.b16 %v136, %v135
    %153 = vmatprep.subr.bf16.mxu0 0
    %154 = vmatpush1.bf16.msra.mxu0 %v144
    %155 = vmatprep.subr.bf16.mxu0 0
    %156 = vmatpush1.bf16.msra.mxu0 %v143
    %157 = vmatprep.subr.bf16.mxu0 0
    %158 = vmatpush1.bf16.msra.mxu0 %v142
    %159 = vmatprep.subr.bf16.mxu0 0
    %160 = vmatpush1.bf16.msra.mxu0 %v141
    %161 = vmatprep.subr.bf16.mxu0 0
    %162 = vmatpush1.bf16.msra.mxu0 %v140
    %163 = vmatprep.subr.bf16.mxu0 0
    %164 = vmatpush1.bf16.msra.mxu0 %v139
    %165 = vmatprep.subr.bf16.mxu0 0
    %166 = vmatpush1.bf16.msra.mxu0 %v138
    %167 = vmatprep.subr.bf16.mxu0 0
    %168 = vmatpush1.bf16.msra.mxu0 %v137
    %169 = vmatprep.subr.bf16.mxu0 0
    %170 = vmatpush2.bf16.msra.mxu0 0
    %171 = vmatprep.subr.bf16.mxu0 0
    %172 = vmatpush2.bf16.msra.mxu0 0
    %173 = vmatprep.subr.bf16.mxu0 0
    %174 = vmatpush2.bf16.msra.mxu0 0
    %175 = vmatprep.subr.bf16.mxu0 0
    %176 = vmatpush2.bf16.msra.mxu0 0
    %177 = vmatprep.subr.bf16.mxu0 0
    %178 = vmatpush2.bf16.msra.mxu0 0
    %179 = vmatprep.subr.bf16.mxu0 0
    %180 = vmatpush2.bf16.msra.mxu0 0
    %181 = vmatprep.subr.bf16.mxu0 0
    %182 = vmatpush2.bf16.msra.mxu0 0
    %183 = vmatprep.subr.bf16.mxu0 0
    %184 = vmatpush2.bf16.msra.mxu0 0
    %185 = vmatprep.mubr.bf16.mxu0 0
    %186 = vmatmul.mubr.bf16.gmra.mxu0 %v82
    %v187 = vpop.f32.mrf.mxu0
    %v188 = vadd.f32 %v104, %v187
    %v189 = vpop.f32.mrf.mxu0
    %v190 = vpop.f32.mrf.mxu0
    %v191 = vpop.f32.mrf.mxu0
    %192 = vdwg.mxu0
    %v193 = vmax.f32 %v188, 0.0
    %v194 = vpack.c.bf16 %v193, %v193
    %v195 = vld [vmem:[#allocation7] sm:$0xf]
    %v196 = vld [vmem:[#allocation7 + $0x4] sm:$0xf]
    %v197 = vld [vmem:[#allocation7 + $0x8] sm:$0xf]
    %v198 = vld [vmem:[#allocation7 + $0xc] sm:$0xf]
    %v199 = vld [vmem:[#allocation7 + $0x10] sm:$0xf]
    %v200 = vld [vmem:[#allocation7 + $0x14] sm:$0xf]
    %v201 = vld [vmem:[#allocation7 + $0x18] sm:$0xf]
    %v202 = vld [vmem:[#allocation7 + $0x1c] sm:$0xf]
    %v203 = vld [vmem:[#allocation7 + $0x20] sm:$0xf]
    %v204 = vld [vmem:[#allocation7 + $0x24] sm:$0xf]
    %v205 = vld [vmem:[#allocation7 + $0x28] sm:$0xf]
    %v206 = vld [vmem:[#allocation7 + $0x2c] sm:$0xf]
    %v207 = vld [vmem:[#allocation7 + $0x30] sm:$0xf]
    %v208 = vld [vmem:[#allocation7 + $0x34] sm:$0xf]
    %v209 = vld [vmem:[#allocation7 + $0x38] sm:$0xf]
    %v210 = vld [vmem:[#allocation7 + $0x3c] sm:$0xf]
    %v211 = vld [vmem:[%s4] sm:$0x1]
    %v212 = vunpack.c.l.bf16 %v211
    %v213 = vlaneseq
    %v214 = vshrl.u32 %v213, 7
    %v215 = vsub.s32 0, %v214
    %v216 = vrot.slane %v212, %v215
    %v233 = vunpack.c.l.b16 %v195
    %v234 = vunpack.c.l.b16 %v196
    %v235 = vunpack.c.l.b16 %v197
    %v236 = vunpack.c.l.b16 %v198
    %v237 = vunpack.c.l.b16 %v199
    %v238 = vunpack.c.l.b16 %v200
    %v239 = vunpack.c.l.b16 %v201
    %v240 = vunpack.c.l.b16 %v202
    %v241 = vunpack.c.l.b16 %v203
    %v242 = vunpack.c.l.b16 %v204
    %v243 = vunpack.c.l.b16 %v205
    %v244 = vunpack.c.l.b16 %v206
    %v245 = vunpack.c.l.b16 %v207
    %v246 = vunpack.c.l.b16 %v208
    %v247 = vunpack.c.l.b16 %v209
    %v248 = vunpack.c.l.b16 %v210
    %v249 = vpack.c.b16 %v234, %v233
    %v250 = vpack.c.b16 %v236, %v235
    %v251 = vpack.c.b16 %v238, %v237
    %v252 = vpack.c.b16 %v240, %v239
    %v253 = vpack.c.b16 %v242, %v241
    %v254 = vpack.c.b16 %v244, %v243
    %v255 = vpack.c.b16 %v246, %v245
    %v256 = vpack.c.b16 %v248, %v247
    %265 = vmatprep.subr.bf16.mxu0 0
    %266 = vmatpush1.bf16.msra.mxu0 %v256
    %267 = vmatprep.subr.bf16.mxu0 0
    %268 = vmatpush1.bf16.msra.mxu0 %v255
    %269 = vmatprep.subr.bf16.mxu0 0
    %270 = vmatpush1.bf16.msra.mxu0 %v254
    %271 = vmatprep.subr.bf16.mxu0 0
    %272 = vmatpush1.bf16.msra.mxu0 %v253
    %273 = vmatprep.subr.bf16.mxu0 0
    %274 = vmatpush1.bf16.msra.mxu0 %v252
    %275 = vmatprep.subr.bf16.mxu0 0
    %276 = vmatpush1.bf16.msra.mxu0 %v251
    %277 = vmatprep.subr.bf16.mxu0 0
    %278 = vmatpush1.bf16.msra.mxu0 %v250
    %279 = vmatprep.subr.bf16.mxu0 0
    %280 = vmatpush1.bf16.msra.mxu0 %v249
    %281 = vmatprep.subr.bf16.mxu0 0
    %282 = vmatpush2.bf16.msra.mxu0 0
    %283 = vmatprep.subr.bf16.mxu0 0
    %284 = vmatpush2.bf16.msra.mxu0 0
    %285 = vmatprep.subr.bf16.mxu0 0
    %286 = vmatpush2.bf16.msra.mxu0 0
    %287 = vmatprep.subr.bf16.mxu0 0
    %288 = vmatpush2.bf16.msra.mxu0 0
    %289 = vmatprep.subr.bf16.mxu0 0
    %290 = vmatpush2.bf16.msra.mxu0 0
    %291 = vmatprep.subr.bf16.mxu0 0
    %292 = vmatpush2.bf16.msra.mxu0 0
    %293 = vmatprep.subr.bf16.mxu0 0
    %294 = vmatpush2.bf16.msra.mxu0 0
    %295 = vmatprep.subr.bf16.mxu0 0
    %296 = vmatpush2.bf16.msra.mxu0 0
    %297 = vmatprep.mubr.bf16.mxu0 0
    %298 = vmatmul.mubr.bf16.gmra.mxu0 %v194
    %v299 = vpop.f32.mrf.mxu0
    %v300 = vadd.f32 %v216, %v299
    %v301 = vpop.f32.mrf.mxu0
    %v302 = vpop.f32.mrf.mxu0
    %v303 = vpop.f32.mrf.mxu0
    %304 = vdwg.mxu0
    %v305 = vmax.f32 %v300, 0.0
    %v306 = vpack.c.bf16 %v305, %v305
    %v307 = vld [vmem:[#allocation8] sm:$0xf]
    %v308 = vld [vmem:[#allocation8 + $0x4] sm:$0xf]
    %v309 = vld [vmem:[#allocation8 + $0x8] sm:$0xf]
    %v310 = vld [vmem:[#allocation8 + $0xc] sm:$0xf]
    %v311 = vld [vmem:[#allocation8 + $0x10] sm:$0xf]
    %v312 = vld [vmem:[#allocation8 + $0x14] sm:$0xf]
    %v313 = vld [vmem:[#allocation8 + $0x18] sm:$0xf]
    %v314 = vld [vmem:[#allocation8 + $0x1c] sm:$0xf]
    %v315 = vld [vmem:[#allocation8 + $0x20] sm:$0xf]
    %v316 = vld [vmem:[#allocation8 + $0x24] sm:$0xf]
    %v317 = vld [vmem:[#allocation8 + $0x28] sm:$0xf]
    %v318 = vld [vmem:[#allocation8 + $0x2c] sm:$0xf]
    %v319 = vld [vmem:[#allocation8 + $0x30] sm:$0xf]
    %v320 = vld [vmem:[#allocation8 + $0x34] sm:$0xf]
    %v321 = vld [vmem:[#allocation8 + $0x38] sm:$0xf]
    %v322 = vld [vmem:[#allocation8 + $0x3c] sm:$0xf]
    %v323 = vld [vmem:[%s6] sm:$0x1]
    %v324 = vunpack.c.l.bf16 %v323
    %v325 = vlaneseq
    %v326 = vshrl.u32 %v325, 7
    %v327 = vsub.s32 0, %v326
    %v328 = vrot.slane %v324, %v327
    %v345 = vunpack.c.l.b16 %v307
    %v346 = vunpack.c.l.b16 %v308
    %v347 = vunpack.c.l.b16 %v309
    %v348 = vunpack.c.l.b16 %v310
    %v349 = vunpack.c.l.b16 %v311
    %v350 = vunpack.c.l.b16 %v312
    %v351 = vunpack.c.l.b16 %v313
    %v352 = vunpack.c.l.b16 %v314
    %v353 = vunpack.c.l.b16 %v315
    %v354 = vunpack.c.l.b16 %v316
    %v355 = vunpack.c.l.b16 %v317
    %v356 = vunpack.c.l.b16 %v318
    %v357 = vunpack.c.l.b16 %v319
    %v358 = vunpack.c.l.b16 %v320
    %v359 = vunpack.c.l.b16 %v321
    %v360 = vunpack.c.l.b16 %v322
    %v361 = vpack.c.b16 %v346, %v345
    %v362 = vpack.c.b16 %v348, %v347
    %v363 = vpack.c.b16 %v350, %v349
    %v364 = vpack.c.b16 %v352, %v351
    %v365 = vpack.c.b16 %v354, %v353
    %v366 = vpack.c.b16 %v356, %v355
    %v367 = vpack.c.b16 %v358, %v357
    %v368 = vpack.c.b16 %v360, %v359
    %377 = vmatprep.subr.bf16.mxu0 0
    %378 = vmatpush1.bf16.msra.mxu0 %v368
    %379 = vmatprep.subr.bf16.mxu0 0
    %380 = vmatpush1.bf16.msra.mxu0 %v367
    %381 = vmatprep.subr.bf16.mxu0 0
    %382 = vmatpush1.bf16.msra.mxu0 %v366
    %383 = vmatprep.subr.bf16.mxu0 0
    %384 = vmatpush1.bf16.msra.mxu0 %v365
    %385 = vmatprep.subr.bf16.mxu0 0
    %386 = vmatpush1.bf16.msra.mxu0 %v364
    %387 = vmatprep.subr.bf16.mxu0 0
    %388 = vmatpush1.bf16.msra.mxu0 %v363
    %389 = vmatprep.subr.bf16.mxu0 0
    %390 = vmatpush1.bf16.msra.mxu0 %v362
    %391 = vmatprep.subr.bf16.mxu0 0
    %392 = vmatpush1.bf16.msra.mxu0 %v361
    %393 = vmatprep.subr.bf16.mxu0 0
    %394 = vmatpush2.bf16.msra.mxu0 0
    %395 = vmatprep.subr.bf16.mxu0 0
    %396 = vmatpush2.bf16.msra.mxu0 0
    %397 = vmatprep.subr.bf16.mxu0 0
    %398 = vmatpush2.bf16.msra.mxu0 0
    %399 = vmatprep.subr.bf16.mxu0 0
    %400 = vmatpush2.bf16.msra.mxu0 0
    %401 = vmatprep.subr.bf16.mxu0 0
    %402 = vmatpush2.bf16.msra.mxu0 0
    %403 = vmatprep.subr.bf16.mxu0 0
    %404 = vmatpush2.bf16.msra.mxu0 0
    %405 = vmatprep.subr.bf16.mxu0 0
    %406 = vmatpush2.bf16.msra.mxu0 0
    %407 = vmatprep.subr.bf16.mxu0 0
    %408 = vmatpush2.bf16.msra.mxu0 0
    %409 = vmatprep.mubr.bf16.mxu0 0
    %410 = vmatmul.mubr.bf16.gmra.mxu0 %v306
    %v411 = vpop.f32.mrf.mxu0
    %v412 = vadd.f32 %v328, %v411
    %v413 = vpop.f32.mrf.mxu0
    %v414 = vpop.f32.mrf.mxu0
    %v415 = vpop.f32.mrf.mxu0
    %416 = vdwg.mxu0
    %417 = vst [vmem:[#allocation10] sm:$0xff] %v412
    // Predicated region
    $region46: #{mlp3_pallas.1} parent=1 // pred_check
      _
    $region47: #{mlp3_pallas.1} parent=1 // pred_check_branch
      %419 = sbr.rel (0) target = $region49
    $region48: #{mlp3_pallas.1} parent=1 // pred_region
      %s421 = ssub.s32 128, 128
      %422 = vsyncadd [#allocation4], %s421
      %s424 = sshll.u32 [#allocation10], 4
      %s425 = int_to_ptr.vmem [resolvable:$true] %s424
      %427 = dma.vmem_to_hbm [thread:$0]  %s425, 128, %s7, [#allocation4]
    $region49: #{mlp3_pallas.1} parent=1 // pred_fallthru
      _
    // Predicated region
    $region50: #{mlp3_pallas.1} parent=1 // pred_check
      _
    $region51: #{mlp3_pallas.1} parent=1 // pred_check_branch
      %429 = sbr.rel (0) target = $region53
    $region52: #{mlp3_pallas.1} parent=1 // pred_region
      %430 = dma.done [#allocation4], 128
    $region53: #{mlp3_pallas.1} parent=1 // pred_fallthru
      _
    %431 = vsyncpa [#allocation3], 1
    %432 = vsyncpa [#allocation6], 1
    %433 = vsyncpa [#allocation9], 1
    %434 = vsyncpa [#allocation4], 1

</llo_original>
